<compile_context>
chip_gen: v6e
topology: v6e:2x2x1
jax: 0.10.0
libtpu: 0.0.40
codegen_flags: <defaults>
</compile_context>

<pallas_src>
import jax
import jax.numpy as jnp
from jax.experimental import pallas as pl
from jax.experimental.pallas import tpu as pltpu


# ----------------------------- Pallas kernel --------------------------------
def _feature_att_kernel(feat_ref, w1_ref, b1_ref, w2_ref, b2_ref, cv_ref,
                        o_ref, gate_ref):
    """grid = (N, num_hw_blocks, num_d_blocks); D blocks are innermost."""
    db = pl.program_id(2)

    # Compute the sigmoid attention gate once per (n, hw-block); reuse it for
    # every D block of the cost volume (scratch persists across grid steps).
    @pl.when(db == 0)
    def _():
        f = feat_ref[0]                                     # (Cf, HWb) f32
        # conv1 (1x1, BN folded into w1/b1) + LeakyReLU(0.01)
        h = jnp.dot(w1_ref[...], f, preferred_element_type=jnp.float32)
        h = h + b1_ref[...]                                 # (Ch, HWb) + (Ch, 1)
        h = jnp.where(h >= 0, h, jnp.float32(0.01) * h)
        # conv2 (1x1, with bias)
        att = jnp.dot(w2_ref[...], h, preferred_element_type=jnp.float32)
        att = att + b2_ref[...]                             # (Cc, HWb) + (Cc, 1)
        # sigmoid (exp goes to the EUP; exact semantics kept)
        gate_ref[...] = 1.0 / (1.0 + jnp.exp(-att))

    # Gate the cost volume block: (1, Cc, Db, HWb) * (1, Cc, 1, HWb)
    gate = gate_ref[...][None, :, None, :]
    o_ref[...] = (cv_ref[...] * gate).astype(o_ref.dtype)


# ------------------------------ wrapper --------------------------------------
def _pick_tile(dim, unit, budget):
    """Largest tile <= budget that divides `dim` and is a multiple of `unit`;
    falls back to the full dim (always a legal TPU block)."""
    if dim <= budget:
        return dim
    t = (budget // unit) * unit
    while t >= unit:
        if dim % t == 0:
            return t
        t -= unit
    return dim


def feature_att_forward(cv, feat, params, *, eps=1e-5):
    """FeatureAtt.forward(cv, feat).

    cv:   (N, cv_chan, D, H, W)   float32
    feat: (N, feat_chan, H, W)    float32
    returns (N, cv_chan, D, H, W) float32
    """
    N, Cc, D, H, W = cv.shape
    Nf, Cf, Hf, Wf = feat.shape
    assert (N, H, W) == (Nf, Hf, Wf)
    Ch = params["w1"].shape[0]          # feat_chan // 2
    HW = H * W

    # --- glue: fold eval-mode BN into conv1; flatten the 1x1 kernels ---------
    scale = params["g1"] / jnp.sqrt(params["v1"] + eps)            # (Ch,)
    w1 = params["w1"].reshape(Ch, Cf) * scale[:, None]             # (Ch, Cf)
    b1 = (params["b1"] - params["m1"] * scale).reshape(Ch, 1)      # (Ch, 1)
    w2 = params["w2"].reshape(Cc, Ch)                              # (Cc, Ch)
    b2 = params["b2"].reshape(Cc, 1)                               # (Cc, 1)

    # Contiguous reshapes (no data movement): spatial flattened to a
    # lane-dense last axis.
    feat3 = feat.reshape(N, Cf, HW).astype(jnp.float32)
    cv4 = cv.reshape(N, Cc, D, HW)

    # Tile HW (lanes) and D (sublanes): keep one cv block ~<= 2 MiB so that
    # double-buffered input + output fit easily on every TPU generation.
    hw_budget = max(128, (2 * 1024 * 1024) // max(1, Cc * min(D, 64) * 4))
    HWb = _pick_tile(HW, 128, hw_budget)
    Db = _pick_tile(D, 8, 64)
    grid = (N, HW // HWb, D // Db)

    out = pl.pallas_call(
        _feature_att_kernel,
        out_shape=jax.ShapeDtypeStruct((N, Cc, D, HW), cv.dtype),
        grid_spec=pltpu.PrefetchScalarGridSpec(
            num_scalar_prefetch=0,
            grid=grid,
            in_specs=[
                # feat: re-fetched only when (n, hwb) changes (same block index
                # across the inner D axis => Pallas skips the redundant DMA).
                pl.BlockSpec((1, Cf, HWb), lambda n, hwb, db: (n, 0, hwb)),
                pl.BlockSpec((Ch, Cf), lambda n, hwb, db: (0, 0)),
                pl.BlockSpec((Ch, 1), lambda n, hwb, db: (0, 0)),
                pl.BlockSpec((Cc, Ch), lambda n, hwb, db: (0, 0)),
                pl.BlockSpec((Cc, 1), lambda n, hwb, db: (0, 0)),
                pl.BlockSpec((1, Cc, Db, HWb),
                             lambda n, hwb, db: (n, 0, db, hwb)),
            ],
            out_specs=pl.BlockSpec((1, Cc, Db, HWb),
                                   lambda n, hwb, db: (n, 0, db, hwb)),
            scratch_shapes=[pltpu.VMEM((Cc, HWb), jnp.float32)],   # gate
        ),
        compiler_params=pltpu.CompilerParams(
            dimension_semantics=("parallel", "parallel", "arbitrary")),
    )(feat3, w1.astype(jnp.float32), b1.astype(jnp.float32),
      w2.astype(jnp.float32), b2.astype(jnp.float32), cv4)

    return out.reshape(N, Cc, D, H, W)


# ------------------------------- params --------------------------------------
def init_params(key, cv_chan, feat_chan):
    k = jax.random.split(key, 7)
    ch = feat_chan // 2
    return {
        # BasicConv: Conv2d(feat_chan, feat_chan//2, 1, bias=False) + BN + LeakyReLU
        "w1": 0.1 * jax.random.normal(k[0], (ch, feat_chan), jnp.float32),
        "g1": 1.0 + 0.1 * jax.random.normal(k[1], (ch,), jnp.float32),   # BN gamma
        "b1": 0.1 * jax.random.normal(k[2], (ch,), jnp.float32),         # BN beta
        "m1": 0.1 * jax.random.normal(k[3], (ch,), jnp.float32),         # BN running mean
        "v1": 1.0 + 0.1 * jax.random.uniform(k[4], (ch,), jnp.float32),  # BN running var
        # nn.Conv2d(feat_chan//2, cv_chan, 1)  (bias=True)
        "w2": 0.1 * jax.random.normal(k[5], (cv_chan, ch), jnp.float32),
        "b2": 0.1 * jax.random.normal(k[6], (cv_chan,), jnp.float32),
    }


# -------------------------------- demo ----------------------------------------
if __name__ == "__main__":
    key = jax.random.PRNGKey(0)
    kcv, kfeat, kp = jax.random.split(key, 3)

    # Small shapes consistent with FeatureAtt: cv is a 5-D cost volume
    # (N, cv_chan, D, H, W); feat is a 4-D feature map (N, feat_chan, H, W).
    N, cv_chan, feat_chan, D, H, W = 2, 8, 16, 16, 16, 16
    cv = jax.random.normal(kcv, (N, cv_chan, D, H, W), jnp.float32)
    feat = jax.random.normal(kfeat, (N, feat_chan, H, W), jnp.float32)
    params = init_params(kp, cv_chan, feat_chan)

    out = feature_att_forward(cv, feat, params)
    out = jax.block_until_ready(out)

    assert out.shape == (N, cv_chan, D, H, W), out.shape
    assert out.dtype == jnp.float32

    # Pure-JAX reference (same math, XLA ops) for a correctness sanity check.
    def ref(cv, feat, p, eps=1e-5):
        s = p["g1"] / jnp.sqrt(p["v1"] + eps)
        h = jnp.einsum("oc,nchw->nohw", p["w1"], feat)
        h = s[None, :, None, None] * (h - p["m1"][None, :, None, None]) \
            + p["b1"][None, :, None, None]
        h = jnp.where(h >= 0, h, 0.01 * h)
        att = jnp.einsum("oc,nchw->nohw", p["w2"], h) + p["b2"][None, :, None, None]
        return jax.nn.sigmoid(att)[:, :, None] * cv

    expected = jax.block_until_ready(ref(cv, feat, params))
    max_err = float(jnp.max(jnp.abs(out - expected)))
    assert max_err < 1e-3, max_err

    print("KERNEL_OK")
</pallas_src>

<mosaic_0001>
module attributes {stable_mosaic.version = 11 : i64} {
  func.func @_feature_att_kernel(%arg0: i32, %arg1: i32, %arg2: i32, %arg3: memref<1x16x256xf32, #tpu.memory_space<vmem>>, %arg4: memref<8x16xf32, #tpu.memory_space<vmem>>, %arg5: memref<8x1xf32, #tpu.memory_space<vmem>>, %arg6: memref<8x8xf32, #tpu.memory_space<vmem>>, %arg7: memref<8x1xf32, #tpu.memory_space<vmem>>, %arg8: memref<1x8x16x256xf32, #tpu.memory_space<vmem>>, %arg9: memref<1x8x16x256xf32, #tpu.memory_space<vmem>>, %arg10: memref<8x256xf32, #tpu.memory_space<vmem>>) attributes {dimension_semantics = [#tpu.dimension_semantics<parallel>, #tpu.dimension_semantics<parallel>, #tpu.dimension_semantics<arbitrary>], iteration_bounds = array<i64: 2, 1, 1>, scalar_prefetch = 0 : i64, scratch_operands = 1 : i64, tpu.core_type = #tpu.core_type<tc>, window_params = [{transform_indices = @transform_0, window_bounds = array<i64: 1, 16, 256>}, {pipeline_mode = #tpu.pipeline_mode<synchronous>, transform_indices = @transform_1, window_bounds = array<i64: 8, 16>}, {pipeline_mode = #tpu.pipeline_mode<synchronous>, transform_indices = @transform_2, window_bounds = array<i64: 8, 1>}, {pipeline_mode = #tpu.pipeline_mode<synchronous>, transform_indices = @transform_3, window_bounds = array<i64: 8, 8>}, {pipeline_mode = #tpu.pipeline_mode<synchronous>, transform_indices = @transform_4, window_bounds = array<i64: 8, 1>}, {transform_indices = @transform_5, window_bounds = array<i64: 1, 8, 16, 256>}, {transform_indices = @transform_6, window_bounds = array<i64: 1, 8, 16, 256>}]} {
    %c0_i32 = arith.constant 0 : i32
    %0 = arith.cmpi eq, %arg2, %c0_i32 : i32
    %1 = arith.extui %0 : i1 to i32
    %c0_i32_0 = arith.constant 0 : i32
    %2 = arith.cmpi ne, %1, %c0_i32_0 : i32
    scf.if %2 {
      %c0_10 = arith.constant 0 : index
      %c0_11 = arith.constant 0 : index
      %c0_12 = arith.constant 0 : index
      %9 = vector.load %arg3[%c0_10, %c0_11, %c0_12] : memref<1x16x256xf32, #tpu.memory_space<vmem>>, vector<1x16x256xf32>
      %10 = vector.shape_cast %9 : vector<1x16x256xf32> to vector<16x256xf32>
      %c0_13 = arith.constant 0 : index
      %c0_14 = arith.constant 0 : index
      %11 = vector.load %arg4[%c0_13, %c0_14] : memref<8x16xf32, #tpu.memory_space<vmem>>, vector<8x16xf32>
      %cst = arith.constant dense<0.000000e+00> : vector<8x256xf32>
      %12 = tpu.matmul %11, %10, %cst {dimension_numbers = #tpu.dot_dimension_numbers<[1], [0], [0], [1], [0, 0, 1, 1], [], []>} : vector<8x16xf32>, vector<16x256xf32>, vector<8x256xf32> -> vector<8x256xf32>
      %c0_15 = arith.constant 0 : index
      %c0_16 = arith.constant 0 : index
      %13 = vector.load %arg5[%c0_15, %c0_16] : memref<8x1xf32, #tpu.memory_space<vmem>>, vector<8x1xf32>
      %14 = vector.broadcast %13 : vector<8x1xf32> to vector<8x256xf32>
      %15 = arith.addf %12, %14 : vector<8x256xf32>
      %cst_17 = arith.constant 0.000000e+00 : f32
      %16 = vector.broadcast %cst_17 : f32 to vector<8x256xf32>
      %17 = arith.cmpf oge, %15, %16 : vector<8x256xf32>
      %cst_18 = arith.constant 0.00999999977 : f32
      %18 = vector.broadcast %cst_18 : f32 to vector<8x256xf32>
      %19 = arith.mulf %18, %15 : vector<8x256xf32>
      %20 = arith.select %17, %15, %19 : vector<8x256xi1>, vector<8x256xf32>
      %c0_19 = arith.constant 0 : index
      %c0_20 = arith.constant 0 : index
      %21 = vector.load %arg6[%c0_19, %c0_20] : memref<8x8xf32, #tpu.memory_space<vmem>>, vector<8x8xf32>
      %cst_21 = arith.constant dense<0.000000e+00> : vector<8x256xf32>
      %22 = tpu.matmul %21, %20, %cst_21 {dimension_numbers = #tpu.dot_dimension_numbers<[1], [0], [0], [1], [0, 0, 1, 1], [], []>} : vector<8x8xf32>, vector<8x256xf32>, vector<8x256xf32> -> vector<8x256xf32>
      %c0_22 = arith.constant 0 : index
      %c0_23 = arith.constant 0 : index
      %23 = vector.load %arg7[%c0_22, %c0_23] : memref<8x1xf32, #tpu.memory_space<vmem>>, vector<8x1xf32>
      %24 = vector.broadcast %23 : vector<8x1xf32> to vector<8x256xf32>
      %25 = arith.addf %22, %24 : vector<8x256xf32>
      %cst_24 = arith.constant 0.000000e+00 : f32
      %26 = vector.broadcast %cst_24 : f32 to vector<8x256xf32>
      %27 = arith.subf %26, %25 : vector<8x256xf32>
      %28 = math.exp %27 : vector<8x256xf32>
      %cst_25 = arith.constant 1.000000e+00 : f32
      %29 = vector.broadcast %cst_25 : f32 to vector<8x256xf32>
      %30 = arith.addf %29, %28 : vector<8x256xf32>
      %cst_26 = arith.constant 1.000000e+00 : f32
      %31 = vector.broadcast %cst_26 : f32 to vector<8x256xf32>
      %32 = arith.divf %31, %30 : vector<8x256xf32>
      %c0_27 = arith.constant 0 : index
      %c0_28 = arith.constant 0 : index
      %33 = vector.load %arg10[%c0_27, %c0_28] : memref<8x256xf32, #tpu.memory_space<vmem>>, vector<8x256xf32>
      tpu.vector_store %arg10[%c0_27, %c0_28], %32 {strides = array<i32>} : memref<8x256xf32, #tpu.memory_space<vmem>>, vector<8x256xf32>,
    } else {
    }
    %c0 = arith.constant 0 : index
    %c0_1 = arith.constant 0 : index
    %3 = vector.load %arg10[%c0, %c0_1] : memref<8x256xf32, #tpu.memory_space<vmem>>, vector<8x256xf32>
    %4 = vector.shape_cast %3 : vector<8x256xf32> to vector<1x8x1x256xf32>
    %c0_2 = arith.constant 0 : index
    %c0_3 = arith.constant 0 : index
    %c0_4 = arith.constant 0 : index
    %c0_5 = arith.constant 0 : index
    %5 = vector.load %arg8[%c0_2, %c0_3, %c0_4, %c0_5] : memref<1x8x16x256xf32, #tpu.memory_space<vmem>>, vector<1x8x16x256xf32>
    %6 = vector.broadcast %4 : vector<1x8x1x256xf32> to vector<1x8x16x256xf32>
    %7 = arith.mulf %5, %6 : vector<1x8x16x256xf32>
    %c0_6 = arith.constant 0 : index
    %c0_7 = arith.constant 0 : index
    %c0_8 = arith.constant 0 : index
    %c0_9 = arith.constant 0 : index
    %8 = vector.load %arg9[%c0_6, %c0_7, %c0_8, %c0_9] : memref<1x8x16x256xf32, #tpu.memory_space<vmem>>, vector<1x8x16x256xf32>
    tpu.vector_store %arg9[%c0_6, %c0_7, %c0_8, %c0_9], %7 {strides = array<i32>} : memref<1x8x16x256xf32, #tpu.memory_space<vmem>>, vector<1x8x16x256xf32>,
    return
  }
  func.func @transform_0(%arg0: i32, %arg1: i32, %arg2: i32) -> (i32, i32, i32) {
    %c0_i32 = arith.constant 0 : i32
    %c0_i32_0 = arith.constant 0 : i32
    return %arg0, %c0_i32, %arg1 : i32, i32, i32
  }
  func.func @transform_1(%arg0: i32, %arg1: i32, %arg2: i32) -> (i32, i32) {
    %c0_i32 = arith.constant 0 : i32
    %c0_i32_0 = arith.constant 0 : i32
    %c0_i32_1 = arith.constant 0 : i32
    return %c0_i32, %c0_i32_0 : i32, i32
  }
  func.func @transform_2(%arg0: i32, %arg1: i32, %arg2: i32) -> (i32, i32) {
    %c0_i32 = arith.constant 0 : i32
    %c0_i32_0 = arith.constant 0 : i32
    %c0_i32_1 = arith.constant 0 : i32
    return %c0_i32, %c0_i32_0 : i32, i32
  }
  func.func @transform_3(%arg0: i32, %arg1: i32, %arg2: i32) -> (i32, i32) {
    %c0_i32 = arith.constant 0 : i32
    %c0_i32_0 = arith.constant 0 : i32
    %c0_i32_1 = arith.constant 0 : i32
    return %c0_i32, %c0_i32_0 : i32, i32
  }
  func.func @transform_4(%arg0: i32, %arg1: i32, %arg2: i32) -> (i32, i32) {
    %c0_i32 = arith.constant 0 : i32
    %c0_i32_0 = arith.constant 0 : i32
    %c0_i32_1 = arith.constant 0 : i32
    return %c0_i32, %c0_i32_0 : i32, i32
  }
  func.func @transform_5(%arg0: i32, %arg1: i32, %arg2: i32) -> (i32, i32, i32, i32) {
    %c0_i32 = arith.constant 0 : i32
    %c0_i32_0 = arith.constant 0 : i32
    return %arg0, %c0_i32, %arg2, %arg1 : i32, i32, i32, i32
  }
  func.func @transform_6(%arg0: i32, %arg1: i32, %arg2: i32) -> (i32, i32, i32, i32) {
    %c0_i32 = arith.constant 0 : i32
    %c0_i32_0 = arith.constant 0 : i32
    return %arg0, %c0_i32, %arg2, %arg1 : i32, i32, i32, i32
  }
}

</mosaic_0001>

<llo_original>
// kernel: tpu_custom_call.1
$region0: #{tpu_custom_call.1}
  #allocation0 [shape = 'u32[]', space=smem, size = 0x4, offset = 0x4, fixed_abs, tag = 'smem constant byte address 0x4 - core index']
  #allocation1 [shape = 'u32[144,128]{1,0:T(1,128)}', space=vmem, size = 0x12000, scoped, tag = 'internal scratch']
  #allocation2 [shape = 'f32[8,256]{1,0:T(8,128)}', space=vmem, size = 0x2000, scoped, tag = 'scratch operand']
  %s0 = inlined_call_operand.hbm [shape: f32[2,16,256], index: 0, kind: input, shape index: {}]
  %s1 = inlined_call_operand.vmem [shape: f32[8,16], index: 1, kind: input, shape index: {}]
  %s2 = inlined_call_operand.vmem [shape: f32[8,1], index: 2, kind: input, shape index: {}]
  %s3 = inlined_call_operand.vmem [shape: f32[8,8], index: 3, kind: input, shape index: {}]
  %s4 = inlined_call_operand.vmem [shape: f32[8,1], index: 4, kind: input, shape index: {}]
  %s5 = inlined_call_operand.hbm [shape: f32[2,8,16,256], index: 5, kind: input, shape index: {}]
  %s6 = inlined_call_operand.hbm [shape: f32[2,8,16,256], index: 6, kind: output, shape index: {}]
  %s7 = sld [smem:[#allocation0]]
  $region69: #{tpu_custom_call.1} parent=0
    _
  %s9 = ssub.s32 1, %s7
  %s10 = scalar_select 0, %s9, %s7
  $region1: #{tpu_custom_call.1} parent=0
    #allocation3 [shape = 'u8[32768]{0}', space=vmem, size = 0x8000, scoped, tag = 'input window, operand 0']
    #allocation4 [shape = 's32[2]{0}', space=sflag, size = 0x8, scoped, tag = 'scoped memory for tpu_custom_call.1']
    #allocation5 [shape = 's32[2]{0}', space=sflag, size = 0x8, scoped, tag = 'scoped memory for tpu_custom_call.1']
    #allocation6 [shape = 'u8[262144]{0}', space=vmem, size = 0x40000, scoped, tag = 'input window, operand 5']
    #allocation7 [shape = 's32[2]{0}', space=sflag, size = 0x8, scoped, tag = 'scoped memory for tpu_custom_call.1']
    #allocation8 [shape = 'u8[262144]{0}', space=vmem, size = 0x40000, scoped, tag = 'output window, operand 0']
    %11 = vsyncpa [#allocation4], 0
    %s12 = scalar_lea.sflag [#allocation4], 1
    %13 = vsyncpa %s12, 0
    %14 = vsyncpa [#allocation7], 0
    %s15 = scalar_lea.sflag [#allocation7], 1
    %16 = vsyncpa %s15, 0
    %17 = vsyncpa [#allocation5], 0
    %s18 = scalar_lea.sflag [#allocation5], 1
    %19 = vsyncpa %s18, 0
    loop: start=0, step=1, limit=4
    $region2: #{tpu_custom_call.1} parent=1 // loop_pre_header
      _
    $region3: #{tpu_custom_call.1} parent=1 // loop_header
      %s21 = sphi 0, %s25
      %p22 = scmp.ge.s32.totalorder %s21, 4
      %s28 = sphi 0, %s47
      %s29 = sphi 0, %s43
      %s30 = sphi 0, %s39
      %s31 = sphi 0, %s28
      %s32 = sphi 0, %s29
      %s33 = sphi 0, %s30
      %s34 = sphi 0, %s31
      %s35 = sphi 0, %s32
      %s36 = sphi 0, %s33
      %s52 = sphi 0, %s54
      %s55 = sphi 0, %s52
      %s56 = sphi 0, %s55
      %s72 = sphi 0, %s56
      %s76 = sphi 0, %s76
      %s78 = sphi 0, %s76
      %s79 = sphi 0, %s78
      %s93 = sphi 0, %s79
      %s97 = sphi 0, %s97
      %s99 = sphi 0, %s97
      %s100 = sphi 0, %s99
      %s114 = sphi 0, %s100
      %s118 = sphi 0, %s118
      %s120 = sphi 0, %s118
      %s121 = sphi 0, %s120
      %s135 = sphi 0, %s121
      %s139 = sphi 0, %s139
      %s141 = sphi 0, %s139
      %s142 = sphi 0, %s141
      %s156 = sphi 0, %s142
      %s166 = sphi 0, %s168
      %s169 = sphi 0, %s166
      %s170 = sphi 0, %s169
      %s186 = sphi 0, %s170
      %s196 = sphi 0, %s198
      %s199 = sphi 0, %s196
      %s200 = sphi 0, %s199
      %s216 = sphi 0, %s200
    $region4: #{tpu_custom_call.1} parent=1 // loop_header_branch
      %24 = sbr.rel (%p22) target = $region8
    $region5: #{tpu_custom_call.1} parent=1 // loop_body
      %s26 = ssub.s32 %s21, 1
      %s27 = ssub.s32 %s21, 2
      %s37 = sadd.s32 1, %s30
      %p38 = scmp.ge.s32.totalorder %s37, 1
      %s39 = scalar_select %p38, 0, %s37
      %s40 = sadd.s32 1, %s29
      %s41 = scalar_select %p38, %s40, %s29
      %p42 = scmp.ge.s32.totalorder %s41, 1
      %s43 = scalar_select %p42, 0, %s41
      %s44 = sadd.s32 1, %s28
      %s45 = scalar_select %p42, %s44, %s28
      %p46 = scmp.ge.s32.totalorder %s45, 2
      %s47 = scalar_select %p46, 0, %s45
      %s48 = ssub.s32 %s28, %s47
      %s49 = ssub.s32 %s29, %s43
      %s50 = sor.u32 %s48, %s49
      %p51 = scmp.eq.s32.totalorder %s50, 0
      %s53 = sadd.s32 %s52, 1
      %s54 = scalar_select %p51, %s52, %s53
      %p57 = pneg %p51
      %p58 = scmp.eq.s32.totalorder %s21, 1
      %p59 = por %p57, %p58
      %p60 = scmp.ne.s32.totalorder %s52, %s55
      %p61 = scmp.eq.s32.totalorder %s21, 0
      %p62 = por %p60, %p61
      %p63 = scmp.ne.s32.totalorder %s52, %s55
      %p64 = scmp.eq.s32.totalorder %s26, 1
      %p65 = por %p63, %p64
      %p66 = scmp.ne.s32.totalorder %s55, %s56
      %p67 = scmp.eq.s32.totalorder %s26, 0
      %p68 = por %p66, %p67
      %p69 = scmp.ne.s32.totalorder %s55, %s56
      %p70 = scmp.eq.s32.totalorder %s27, 1
      %p71 = por %p69, %p70
      %p73 = scmp.ne.s32.totalorder %s56, %s72
      %p74 = scmp.eq.s32.totalorder %s27, 0
      %p75 = por %p73, %p74
      %s77 = sadd.s32 %s76, 1
      %p80 = scmp.eq.s32.totalorder %s21, 1
      %p81 = scmp.ne.s32.totalorder %s76, %s78
      %p82 = scmp.eq.s32.totalorder %s21, 0
      %p83 = por %p81, %p82
      %p84 = scmp.ne.s32.totalorder %s76, %s78
      %p85 = scmp.eq.s32.totalorder %s26, 1
      %p86 = por %p84, %p85
      %p87 = scmp.ne.s32.totalorder %s78, %s79
      %p88 = scmp.eq.s32.totalorder %s26, 0
      %p89 = por %p87, %p88
      %p90 = scmp.ne.s32.totalorder %s78, %s79
      %p91 = scmp.eq.s32.totalorder %s27, 1
      %p92 = por %p90, %p91
      %p94 = scmp.ne.s32.totalorder %s79, %s93
      %p95 = scmp.eq.s32.totalorder %s27, 0
      %p96 = por %p94, %p95
      %s98 = sadd.s32 %s97, 1
      %p101 = scmp.eq.s32.totalorder %s21, 1
      %p102 = scmp.ne.s32.totalorder %s97, %s99
      %p103 = scmp.eq.s32.totalorder %s21, 0
      %p104 = por %p102, %p103
      %p105 = scmp.ne.s32.totalorder %s97, %s99
      %p106 = scmp.eq.s32.totalorder %s26, 1
      %p107 = por %p105, %p106
      %p108 = scmp.ne.s32.totalorder %s99, %s100
      %p109 = scmp.eq.s32.totalorder %s26, 0
      %p110 = por %p108, %p109
      %p111 = scmp.ne.s32.totalorder %s99, %s100
      %p112 = scmp.eq.s32.totalorder %s27, 1
      %p113 = por %p111, %p112
      %p115 = scmp.ne.s32.totalorder %s100, %s114
      %p116 = scmp.eq.s32.totalorder %s27, 0
      %p117 = por %p115, %p116
      %s119 = sadd.s32 %s118, 1
      %p122 = scmp.eq.s32.totalorder %s21, 1
      %p123 = scmp.ne.s32.totalorder %s118, %s120
      %p124 = scmp.eq.s32.totalorder %s21, 0
      %p125 = por %p123, %p124
      %p126 = scmp.ne.s32.totalorder %s118, %s120
      %p127 = scmp.eq.s32.totalorder %s26, 1
      %p128 = por %p126, %p127
      %p129 = scmp.ne.s32.totalorder %s120, %s121
      %p130 = scmp.eq.s32.totalorder %s26, 0
      %p131 = por %p129, %p130
      %p132 = scmp.ne.s32.totalorder %s120, %s121
      %p133 = scmp.eq.s32.totalorder %s27, 1
      %p134 = por %p132, %p133
      %p136 = scmp.ne.s32.totalorder %s121, %s135
      %p137 = scmp.eq.s32.totalorder %s27, 0
      %p138 = por %p136, %p137
      %s140 = sadd.s32 %s139, 1
      %p143 = scmp.eq.s32.totalorder %s21, 1
      %p144 = scmp.ne.s32.totalorder %s139, %s141
      %p145 = scmp.eq.s32.totalorder %s21, 0
      %p146 = por %p144, %p145
      %p147 = scmp.ne.s32.totalorder %s139, %s141
      %p148 = scmp.eq.s32.totalorder %s26, 1
      %p149 = por %p147, %p148
      %p150 = scmp.ne.s32.totalorder %s141, %s142
      %p151 = scmp.eq.s32.totalorder %s26, 0
      %p152 = por %p150, %p151
      %p153 = scmp.ne.s32.totalorder %s141, %s142
      %p154 = scmp.eq.s32.totalorder %s27, 1
      %p155 = por %p153, %p154
      %p157 = scmp.ne.s32.totalorder %s142, %s156
      %p158 = scmp.eq.s32.totalorder %s27, 0
      %p159 = por %p157, %p158
      %s160 = ssub.s32 %s28, %s47
      %s161 = ssub.s32 %s30, %s39
      %s162 = sor.u32 %s160, %s161
      %s163 = ssub.s32 %s29, %s43
      %s164 = sor.u32 %s162, %s163
      %p165 = scmp.eq.s32.totalorder %s164, 0
      %s167 = sadd.s32 %s166, 1
      %s168 = scalar_select %p165, %s166, %s167
      %p171 = pneg %p165
      %p172 = scmp.eq.s32.totalorder %s21, 1
      %p173 = por %p171, %p172
      %p174 = scmp.ne.s32.totalorder %s166, %s169
      %p175 = scmp.eq.s32.totalorder %s21, 0
      %p176 = por %p174, %p175
      %p177 = scmp.ne.s32.totalorder %s166, %s169
      %p178 = scmp.eq.s32.totalorder %s26, 1
      %p179 = por %p177, %p178
      %p180 = scmp.ne.s32.totalorder %s169, %s170
      %p181 = scmp.eq.s32.totalorder %s26, 0
      %p182 = por %p180, %p181
      %p183 = scmp.ne.s32.totalorder %s169, %s170
      %p184 = scmp.eq.s32.totalorder %s27, 1
      %p185 = por %p183, %p184
      %p187 = scmp.ne.s32.totalorder %s170, %s186
      %p188 = scmp.eq.s32.totalorder %s27, 0
      %p189 = por %p187, %p188
      %s190 = ssub.s32 %s28, %s47
      %s191 = ssub.s32 %s30, %s39
      %s192 = sor.u32 %s190, %s191
      %s193 = ssub.s32 %s29, %s43
      %s194 = sor.u32 %s192, %s193
      %p195 = scmp.eq.s32.totalorder %s194, 0
      %s197 = sadd.s32 %s196, 1
      %s198 = scalar_select %p195, %s196, %s197
      %p201 = pneg %p195
      %p202 = scmp.eq.s32.totalorder %s21, 1
      %p203 = por %p201, %p202
      %p204 = scmp.ne.s32.totalorder %s196, %s199
      %p205 = scmp.eq.s32.totalorder %s21, 0
      %p206 = por %p204, %p205
      %p207 = scmp.ne.s32.totalorder %s196, %s199
      %p208 = scmp.eq.s32.totalorder %s26, 1
      %p209 = por %p207, %p208
      %p210 = scmp.ne.s32.totalorder %s199, %s200
      %p211 = scmp.eq.s32.totalorder %s26, 0
      %p212 = por %p210, %p211
      %p213 = scmp.ne.s32.totalorder %s199, %s200
      %p214 = scmp.eq.s32.totalorder %s27, 1
      %p215 = por %p213, %p214
      %p217 = scmp.ne.s32.totalorder %s200, %s216
      %p218 = scmp.eq.s32.totalorder %s27, 0
      %p219 = por %p217, %p218
      %p220 = scmp.le.s32.totalorder 1, %s21
      %p221 = scmp.lt.s32.totalorder %s21, 3
      %p222 = pnand %p220, %p221
      %p223 = pneg %p222
      // Predicated region
      $region9: #{tpu_custom_call.1} parent=5 // pred_check
        _
      $region10: #{tpu_custom_call.1} parent=5 // pred_check_branch
        %225 = sbr.rel (%p222) target = $region12
      $region11: #{tpu_custom_call.1} parent=5 // pred_region
        %s226 = ssub.s32 %s21, 1
        // Predicated region
        $region13: #{tpu_custom_call.1} parent=11 // pred_check
          %p227 = pneg %p89
        $region14: #{tpu_custom_call.1} parent=11 // pred_check_branch
          %229 = sbr.rel (%p227) target = $region16
        $region15: #{tpu_custom_call.1} parent=11 // pred_region
          _
        $region16: #{tpu_custom_call.1} parent=11 // pred_fallthru
          _
        // Predicated region
        $region17: #{tpu_custom_call.1} parent=11 // pred_check
          %p230 = pneg %p110
        $region18: #{tpu_custom_call.1} parent=11 // pred_check_branch
          %232 = sbr.rel (%p230) target = $region20
        $region19: #{tpu_custom_call.1} parent=11 // pred_region
          _
        $region20: #{tpu_custom_call.1} parent=11 // pred_fallthru
          _
        // Predicated region
        $region21: #{tpu_custom_call.1} parent=11 // pred_check
          %p233 = pneg %p131
        $region22: #{tpu_custom_call.1} parent=11 // pred_check_branch
          %235 = sbr.rel (%p233) target = $region24
        $region23: #{tpu_custom_call.1} parent=11 // pred_region
          _
        $region24: #{tpu_custom_call.1} parent=11 // pred_fallthru
          _
        // Predicated region
        $region25: #{tpu_custom_call.1} parent=11 // pred_check
          %p236 = pneg %p152
        $region26: #{tpu_custom_call.1} parent=11 // pred_check_branch
          %238 = sbr.rel (%p236) target = $region28
        $region27: #{tpu_custom_call.1} parent=11 // pred_region
          _
        $region28: #{tpu_custom_call.1} parent=11 // pred_fallthru
          _
      $region12: #{tpu_custom_call.1} parent=5 // pred_fallthru
        _
      %p239 = scmp.lt.s32.totalorder %s21, 2
      // Predicated region
      $region29: #{tpu_custom_call.1} parent=5 // pred_check
        %p240 = pneg %p239
      $region30: #{tpu_custom_call.1} parent=5 // pred_check_branch
        %242 = sbr.rel (%p240) target = $region32
      $region31: #{tpu_custom_call.1} parent=5 // pred_region
        // Predicated region
        $region33: #{tpu_custom_call.1} parent=31 // pred_check
          %p243 = pneg %p62
        $region34: #{tpu_custom_call.1} parent=31 // pred_check_branch
          %245 = sbr.rel (%p243) target = $region36
        $region35: #{tpu_custom_call.1} parent=31 // pred_region
          %s246 = sand.u32 %s52, 1
          %s247 = scalar_lea.sflag [#allocation4], %s246
          %s248 = sand.u32 %s52, 1
          %s249 = smul.addr %s248, 32
          %s250 = scalar_lea.vmem [#allocation3], %s249
          %s251 = smul.u32 2, %s29
          %s253 = ssub.s32 512, 512
          %254 = vsyncadd %s247, %s253
          %s255 = smul.addr %s28, 4
          %s256 = sadd.s32 %s251, %s255
          %s257 = smul.addr %s256, 128
          %s258 = scalar_lea.hbm %s0, %s257
          %s259 = sshll.u32 %s250, 4
          %s260 = int_to_ptr.vmem [resolvable:$true] %s259
          %265 = dma.hbm_to_vmem [thread:$0]  %s258, 512, %s260, %s247, 256, 256, 16
        $region36: #{tpu_custom_call.1} parent=31 // pred_fallthru
          _
        // Predicated region
        $region37: #{tpu_custom_call.1} parent=31 // pred_check
          %p266 = pneg %p176
        $region38: #{tpu_custom_call.1} parent=31 // pred_check_branch
          %268 = sbr.rel (%p266) target = $region40
        $region39: #{tpu_custom_call.1} parent=31 // pred_region
          %s269 = sand.u32 %s166, 1
          %s270 = scalar_lea.sflag [#allocation7], %s269
          %s271 = sand.u32 %s166, 1
          %s272 = smul.addr %s271, 256
          %s273 = scalar_lea.vmem [#allocation6], %s272
          %s274 = smul.u32 2, %s30
          %s275 = smul.u32 2, %s29
          %s277 = ssub.s32 4096, 4096
          %278 = vsyncadd %s270, %s277
          %s279 = smul.addr %s274, 2
          %s280 = sadd.s32 %s275, %s279
          %s281 = smul.addr %s28, 32
          %s282 = sadd.s32 %s280, %s281
          %s283 = smul.addr %s282, 128
          %s284 = scalar_lea.hbm %s5, %s283
          %s285 = sshll.u32 %s273, 4
          %s286 = int_to_ptr.vmem [resolvable:$true] %s285
          %291 = dma.hbm_to_vmem [thread:$0]  %s284, 4096, %s286, %s270, 256, 256, 16
        $region40: #{tpu_custom_call.1} parent=31 // pred_fallthru
          _
      $region32: #{tpu_custom_call.1} parent=5 // pred_fallthru
        _
      %p292 = scmp.le.s32.totalorder 1, %s21
      %p293 = scmp.lt.s32.totalorder %s21, 3
      %p294 = pnand %p292, %p293
      %p295 = pneg %p294
      // Predicated region
      $region41: #{tpu_custom_call.1} parent=5 // pred_check
        _
      $region42: #{tpu_custom_call.1} parent=5 // pred_check_branch
        %297 = sbr.rel (%p294) target = $region44
      $region43: #{tpu_custom_call.1} parent=5 // pred_region
        %s298 = ssub.s32 %s21, 1
        %s299 = sand.u32 %s55, 1
        %s300 = scalar_lea.sflag [#allocation4], %s299
        %s301 = sand.u32 %s55, 1
        %s302 = smul.addr %s301, 32
        %s303 = scalar_lea.vmem [#allocation3], %s302
        // Predicated region
        $region45: #{tpu_custom_call.1} parent=43 // pred_check
          %p304 = pneg %p68
        $region46: #{tpu_custom_call.1} parent=43 // pred_check_branch
          %306 = sbr.rel (%p304) target = $region48
        $region47: #{tpu_custom_call.1} parent=43 // pred_region
          %307 = dma.done %s300, 512
        $region48: #{tpu_custom_call.1} parent=43 // pred_fallthru
          _
        %s308 = sand.u32 %s169, 1
        %s309 = scalar_lea.sflag [#allocation7], %s308
        %s310 = sand.u32 %s169, 1
        %s311 = smul.addr %s310, 256
        %s312 = scalar_lea.vmem [#allocation6], %s311
        // Predicated region
        $region49: #{tpu_custom_call.1} parent=43 // pred_check
          %p313 = pneg %p182
        $region50: #{tpu_custom_call.1} parent=43 // pred_check_branch
          %315 = sbr.rel (%p313) target = $region52
        $region51: #{tpu_custom_call.1} parent=43 // pred_region
          %316 = dma.done %s309, 4096
        $region52: #{tpu_custom_call.1} parent=43 // pred_fallthru
          _
        %s317 = sand.u32 %s55, 1
        %s318 = scalar_lea.sflag [#allocation4], %s317
        %s319 = sand.u32 %s55, 1
        %s320 = smul.addr %s319, 32
        %s321 = scalar_lea.vmem [#allocation3], %s320
        %p322 = pneg %p68
        %p323 = pneg %p65
        %p324 = pneg %p89
        %p325 = pneg %p86
        %p326 = pneg %p110
        %p327 = pneg %p107
        %p328 = pneg %p131
        %p329 = pneg %p128
        %p330 = pneg %p152
        %p331 = pneg %p149
        %s332 = sand.u32 %s169, 1
        %s333 = scalar_lea.sflag [#allocation7], %s332
        %s334 = sand.u32 %s169, 1
        %s335 = smul.addr %s334, 256
        %s336 = scalar_lea.vmem [#allocation6], %s335
        %p337 = pneg %p182
        %p338 = pneg %p179
        %p339 = pneg %p212
        %p340 = pneg %p209
        %s341 = sand.u32 %s199, 1
        %s342 = scalar_lea.sflag [#allocation5], %s341
        %s343 = sand.u32 %s199, 1
        %s344 = smul.addr %s343, 256
        %s345 = scalar_lea.vmem [#allocation8], %s344
        %s346 = smul.u32 2, %s32
        %s347 = smul.u32 2, %s33
        %s348 = smul.u32 2, %s32
        %s349 = smul.u32 2, %s33
        %s350 = smul.u32 2, %s32
        %p351 = scmp.eq.s32.totalorder %s33, 0
        // Predicated region
        $region53: #{tpu_custom_call.1} parent=43 // pred_check
          %p352 = pneg %p351
        $region54: #{tpu_custom_call.1} parent=43 // pred_check_branch
          %354 = sbr.rel (%p352) target = $region56
        $region55: #{tpu_custom_call.1} parent=43 // pred_region
          %v355 = vld [vmem:[%s303] sm:$0xff]
          %v356 = vld [vmem:[%s303 + $0x8] sm:$0xff]
          %v357 = vld [vmem:[%s303 + $0x10] sm:$0xff]
          %v358 = vld [vmem:[%s303 + $0x18] sm:$0xff]
          %v359 = vld [vmem:[%s1] sm:$0xff]
          %v360 = vld [vmem:[%s2] sm:$0xff]
          %362 = vset.pattern.permute.xlu0 0
          %363 = vperm.xlu0 %362, %v360
          %v364 = vpop.permute.xlu0 %363
          %vm366 = vcmask 130048
          %v368 = vsel %vm366, %v359, 0
          %370 = vmatprep.subr.mxu0 0.0
          %371 = vmatpush1.msra.mxu0 0.0
          %372 = vmatprep.subr.mxu0 0.0
          %373 = vmatpush1.msra.mxu0 0.0
          %374 = vmatprep.subr.mxu0 0.0
          %375 = vmatpush1.msra.mxu0 0.0
          %376 = vmatprep.subr.mxu0 0.0
          %377 = vmatpush1.msra.mxu0 0.0
          %378 = vmatprep.subr.mxu0 0.0
          %379 = vmatpush1.msra.mxu0 0.0
          %380 = vmatprep.subr.mxu0 0.0
          %381 = vmatpush1.msra.mxu0 0.0
          %382 = vmatprep.subr.mxu0 0.0
          %383 = vmatpush1.msra.mxu0 0.0
          %384 = vmatprep.subr.mxu0 0.0
          %385 = vmatpush1.msra.mxu0 0.0
          %386 = vmatprep.subr.mxu0 0.0
          %387 = vmatpush1.msra.mxu0 0.0
          %388 = vmatprep.subr.mxu0 0.0
          %389 = vmatpush1.msra.mxu0 0.0
          %390 = vmatprep.subr.mxu0 0.0
          %391 = vmatpush1.msra.mxu0 0.0
          %392 = vmatprep.subr.mxu0 0.0
          %393 = vmatpush1.msra.mxu0 0.0
          %394 = vmatprep.subr.mxu0 0.0
          %395 = vmatpush1.msra.mxu0 0.0
          %396 = vmatprep.subr.mxu0 0.0
          %397 = vmatpush1.msra.mxu0 0.0
          %398 = vmatprep.subr.mxu0 %v358
          %399 = vmatpush1.msra.mxu0 %v357
          %400 = vmatprep.subr.mxu0 %v356
          %401 = vmatpush1.msra.mxu0 %v355
          %402 = vmatprep.subr.mxu0 0.0
          %403 = vmatpush2.msra.mxu0 0.0
          %404 = vmatprep.subr.mxu0 0.0
          %405 = vmatpush2.msra.mxu0 0.0
          %406 = vmatprep.subr.mxu0 0.0
          %407 = vmatpush2.msra.mxu0 0.0
          %408 = vmatprep.subr.mxu0 0.0
          %409 = vmatpush2.msra.mxu0 0.0
          %410 = vmatprep.subr.mxu0 0.0
          %411 = vmatpush2.msra.mxu0 0.0
          %412 = vmatprep.subr.mxu0 0.0
          %413 = vmatpush2.msra.mxu0 0.0
          %414 = vmatprep.subr.mxu0 0.0
          %415 = vmatpush2.msra.mxu0 0.0
          %416 = vmatprep.subr.mxu0 0.0
          %417 = vmatpush2.msra.mxu0 0.0
          %418 = vmatprep.subr.mxu0 0.0
          %419 = vmatpush2.msra.mxu0 0.0
          %420 = vmatprep.subr.mxu0 0.0
          %421 = vmatpush2.msra.mxu0 0.0
          %422 = vmatprep.subr.mxu0 0.0
          %423 = vmatpush2.msra.mxu0 0.0
          %424 = vmatprep.subr.mxu0 0.0
          %425 = vmatpush2.msra.mxu0 0.0
          %426 = vmatprep.subr.mxu0 0.0
          %427 = vmatpush2.msra.mxu0 0.0
          %428 = vmatprep.subr.mxu0 0.0
          %429 = vmatpush2.msra.mxu0 0.0
          %430 = vmatprep.subr.mxu0 0.0
          %431 = vmatpush2.msra.mxu0 0.0
          %432 = vmatprep.subr.mxu0 0.0
          %433 = vmatpush2.msra.mxu0 0.0
          %434 = vmatprep.mubr.f32.mxu0 0.0
          %435 = vmatmul.mubr.f32.gmra.mxu0 %v368
          %v436 = vpop.f32.mrf.mxu0
          %v437 = vadd.f32 %v364, %v436
          %v438 = vpop.f32.mrf.mxu0
          %v439 = vadd.f32 %v364, %v438
          %440 = vdwg.mxu0
          %vm441 = vcmp.ge.f32.partialorder %v437, 0.0
          %vm442 = vcmp.ge.f32.partialorder %v439, 0.0
          %v443 = vmul.f32 %v437, 0.01
          %v444 = vmul.f32 %v439, 0.01
          %v445 = vsel %vm441, %v437, %v443
          %v446 = vsel %vm442, %v439, %v444
          %v447 = vld [vmem:[%s3] sm:$0xff]
          %v448 = vld [vmem:[%s4] sm:$0xff]
          %450 = vset.pattern.permute.xlu0 0
          %451 = vperm.xlu0 %450, %v448
          %v452 = vpop.permute.xlu0 %451
          %vm454 = vcmask 64512
          %v456 = vsel %vm454, %v447, 0
          %458 = vmatprep.subr.mxu0 0.0
          %459 = vmatpush1.msra.mxu0 0.0
          %460 = vmatprep.subr.mxu0 0.0
          %461 = vmatpush1.msra.mxu0 0.0
          %462 = vmatprep.subr.mxu0 0.0
          %463 = vmatpush1.msra.mxu0 0.0
          %464 = vmatprep.subr.mxu0 0.0
          %465 = vmatpush1.msra.mxu0 0.0
          %466 = vmatprep.subr.mxu0 0.0
          %467 = vmatpush1.msra.mxu0 0.0
          %468 = vmatprep.subr.mxu0 0.0
          %469 = vmatpush1.msra.mxu0 0.0
          %470 = vmatprep.subr.mxu0 0.0
          %471 = vmatpush1.msra.mxu0 0.0
          %472 = vmatprep.subr.mxu0 0.0
          %473 = vmatpush1.msra.mxu0 0.0
          %474 = vmatprep.subr.mxu0 0.0
          %475 = vmatpush1.msra.mxu0 0.0
          %476 = vmatprep.subr.mxu0 0.0
          %477 = vmatpush1.msra.mxu0 0.0
          %478 = vmatprep.subr.mxu0 0.0
          %479 = vmatpush1.msra.mxu0 0.0
          %480 = vmatprep.subr.mxu0 0.0
          %481 = vmatpush1.msra.mxu0 0.0
          %482 = vmatprep.subr.mxu0 0.0
          %483 = vmatpush1.msra.mxu0 0.0
          %484 = vmatprep.subr.mxu0 0.0
          %485 = vmatpush1.msra.mxu0 0.0
          %486 = vmatprep.subr.mxu0 0.0
          %487 = vmatpush1.msra.mxu0 0.0
          %488 = vmatprep.subr.mxu0 %v446
          %489 = vmatpush1.msra.mxu0 %v445
          %490 = vmatprep.subr.mxu0 0.0
          %491 = vmatpush2.msra.mxu0 0.0
          %492 = vmatprep.subr.mxu0 0.0
          %493 = vmatpush2.msra.mxu0 0.0
          %494 = vmatprep.subr.mxu0 0.0
          %495 = vmatpush2.msra.mxu0 0.0
          %496 = vmatprep.subr.mxu0 0.0
          %497 = vmatpush2.msra.mxu0 0.0
          %498 = vmatprep.subr.mxu0 0.0
          %499 = vmatpush2.msra.mxu0 0.0
          %500 = vmatprep.subr.mxu0 0.0
          %501 = vmatpush2.msra.mxu0 0.0
          %502 = vmatprep.subr.mxu0 0.0
          %503 = vmatpush2.msra.mxu0 0.0
          %504 = vmatprep.subr.mxu0 0.0
          %505 = vmatpush2.msra.mxu0 0.0
          %506 = vmatprep.subr.mxu0 0.0
          %507 = vmatpush2.msra.mxu0 0.0
          %508 = vmatprep.subr.mxu0 0.0
          %509 = vmatpush2.msra.mxu0 0.0
          %510 = vmatprep.subr.mxu0 0.0
          %511 = vmatpush2.msra.mxu0 0.0
          %512 = vmatprep.subr.mxu0 0.0
          %513 = vmatpush2.msra.mxu0 0.0
          %514 = vmatprep.subr.mxu0 0.0
          %515 = vmatpush2.msra.mxu0 0.0
          %516 = vmatprep.subr.mxu0 0.0
          %517 = vmatpush2.msra.mxu0 0.0
          %518 = vmatprep.subr.mxu0 0.0
          %519 = vmatpush2.msra.mxu0 0.0
          %520 = vmatprep.subr.mxu0 0.0
          %521 = vmatpush2.msra.mxu0 0.0
          %522 = vmatprep.mubr.f32.mxu0 0.0
          %523 = vmatmul.mubr.f32.gmra.mxu0 %v456
          %v524 = vpop.f32.mrf.mxu0
          %v525 = vadd.f32 %v452, %v524
          %v526 = vpop.f32.mrf.mxu0
          %v527 = vadd.f32 %v452, %v526
          %528 = vdwg.mxu0
          %v529 = vsub.f32 0.0, %v525
          %v530 = vsub.f32 0.0, %v527
          %v531 = vmul.f32 %v529, 1.442695
          %v532 = vpow.pop %v531
          %v533 = vmul.f32 %v530, 1.442695
          %v534 = vpow.pop %v533
          %v535 = vadd.f32 %v532, 1.0
          %v536 = vadd.f32 %v534, 1.0
          %v537 = vrcp.pop %v535
          %v538 = vmul.f32 1.0, %v537
          %v539 = vrcp.pop %v536
          %v540 = vmul.f32 1.0, %v539
          %541 = vst [vmem:[#allocation2] sm:$0xff] %v538
          %542 = vst [vmem:[#allocation2 + $0x8] sm:$0xff] %v540
        $region56: #{tpu_custom_call.1} parent=43 // pred_fallthru
          _
        %v543 = vld [vmem:[#allocation2] sm:$0xff]
        %v544 = vld [vmem:[#allocation2 + $0x8] sm:$0xff]
        %v547 = vcombine.low %v543, %v544
        %v548 = vcombine.high %v543, %v544
        %v550 = vunpack.c.l.s4 1966171168
        %v551 = vunpack.c.0.s8 %v550
        %v552 = vlaneseq
        %v553 = vshrl.u32 %v552, 7
        %v554 = vsub.s32 %v551, %v553
        %v555 = vrot.slane %v547, %v554
        %v557 = vunpack.c.l.s4 1966171168
        %v558 = vunpack.c.0.s8 %v557
        %v559 = vlaneseq
        %v560 = vshrl.u32 %v559, 7
        %v561 = vsub.s32 %v558, %v560
        %v562 = vrot.slane %v548, %v561
        %v563 = vcombine.high %v555, %v555
        %v564 = vcombine.high %v562, %v562
        %v566 = vunpack.c.l.s4 1966171168
        %v567 = vunpack.c.0.s8 %v566
        %v568 = vlaneseq
        %v569 = vshrl.u32 %v568, 7
        %v570 = vsub.s32 %v567, %v569
        %v571 = vrot.slane %v555, %v570
        %v573 = vunpack.c.l.s4 1966171168
        %v574 = vunpack.c.0.s8 %v573
        %v575 = vlaneseq
        %v576 = vshrl.u32 %v575, 7
        %v577 = vsub.s32 %v574, %v576
        %v578 = vrot.slane %v562, %v577
        %v580 = vunpack.c.l.s4 1966171168
        %v581 = vunpack.c.0.s8 %v580
        %v582 = vlaneseq
        %v583 = vshrl.u32 %v582, 7
        %v584 = vsub.s32 %v581, %v583
        %v585 = vrot.slane %v563, %v584
        %v587 = vunpack.c.l.s4 1966171168
        %v588 = vunpack.c.0.s8 %v587
        %v589 = vlaneseq
        %v590 = vshrl.u32 %v589, 7
        %v591 = vsub.s32 %v588, %v590
        %v592 = vrot.slane %v564, %v591
        %v593 = vcombine.high %v571, %v571
        %v594 = vcombine.high %v578, %v578
        %v595 = vcombine.high %v585, %v585
        %v596 = vcombine.high %v592, %v592
        %v597 = vld [vmem:[%s312] sm:$0xff]
        %v598 = vld [vmem:[%s312 + $0x8] sm:$0xff]
        %v599 = vld [vmem:[%s312 + $0x10] sm:$0xff]
        %v600 = vld [vmem:[%s312 + $0x18] sm:$0xff]
        %v601 = vld [vmem:[%s312 + $0x20] sm:$0xff]
        %v602 = vld [vmem:[%s312 + $0x28] sm:$0xff]
        %v603 = vld [vmem:[%s312 + $0x30] sm:$0xff]
        %v604 = vld [vmem:[%s312 + $0x38] sm:$0xff]
        %v605 = vld [vmem:[%s312 + $0x40] sm:$0xff]
        %v606 = vld [vmem:[%s312 + $0x48] sm:$0xff]
        %v607 = vld [vmem:[%s312 + $0x50] sm:$0xff]
        %v608 = vld [vmem:[%s312 + $0x58] sm:$0xff]
        %v609 = vld [vmem:[%s312 + $0x60] sm:$0xff]
        %v610 = vld [vmem:[%s312 + $0x68] sm:$0xff]
        %v611 = vld [vmem:[%s312 + $0x70] sm:$0xff]
        %v612 = vld [vmem:[%s312 + $0x78] sm:$0xff]
        %v613 = vld [vmem:[%s312 + $0x80] sm:$0xff]
        %v614 = vld [vmem:[%s312 + $0x88] sm:$0xff]
        %v615 = vld [vmem:[%s312 + $0x90] sm:$0xff]
        %v616 = vld [vmem:[%s312 + $0x98] sm:$0xff]
        %v617 = vld [vmem:[%s312 + $0xa0] sm:$0xff]
        %v618 = vld [vmem:[%s312 + $0xa8] sm:$0xff]
        %v619 = vld [vmem:[%s312 + $0xb0] sm:$0xff]
        %v620 = vld [vmem:[%s312 + $0xb8] sm:$0xff]
        %v621 = vld [vmem:[%s312 + $0xc0] sm:$0xff]
        %v622 = vld [vmem:[%s312 + $0xc8] sm:$0xff]
        %v623 = vld [vmem:[%s312 + $0xd0] sm:$0xff]
        %v624 = vld [vmem:[%s312 + $0xd8] sm:$0xff]
        %v625 = vld [vmem:[%s312 + $0xe0] sm:$0xff]
        %v626 = vld [vmem:[%s312 + $0xe8] sm:$0xff]
        %v627 = vld [vmem:[%s312 + $0xf0] sm:$0xff]
        %v628 = vld [vmem:[%s312 + $0xf8] sm:$0xff]
        %v629 = vlaneseq
        %v630 = vshrl.u32 %v629, 7
        %v631 = vsub.s32 0, %v630
        %v632 = vrot.slane %v571, %v631
        %v633 = vlaneseq
        %v634 = vshrl.u32 %v633, 7
        %v635 = vsub.s32 1, %v634
        %v636 = vrot.slane %v571, %v635
        %v637 = vlaneseq
        %v638 = vshrl.u32 %v637, 7
        %v639 = vsub.s32 0, %v638
        %v640 = vrot.slane %v585, %v639
        %v641 = vlaneseq
        %v642 = vshrl.u32 %v641, 7
        %v643 = vsub.s32 1, %v642
        %v644 = vrot.slane %v585, %v643
        %v645 = vlaneseq
        %v646 = vshrl.u32 %v645, 7
        %v647 = vsub.s32 0, %v646
        %v648 = vrot.slane %v593, %v647
        %v649 = vlaneseq
        %v650 = vshrl.u32 %v649, 7
        %v651 = vsub.s32 1, %v650
        %v652 = vrot.slane %v593, %v651
        %v653 = vlaneseq
        %v654 = vshrl.u32 %v653, 7
        %v655 = vsub.s32 0, %v654
        %v656 = vrot.slane %v595, %v655
        %v657 = vlaneseq
        %v658 = vshrl.u32 %v657, 7
        %v659 = vsub.s32 1, %v658
        %v660 = vrot.slane %v595, %v659
        %v661 = vlaneseq
        %v662 = vshrl.u32 %v661, 7
        %v663 = vsub.s32 0, %v662
        %v664 = vrot.slane %v578, %v663
        %v665 = vlaneseq
        %v666 = vshrl.u32 %v665, 7
        %v667 = vsub.s32 1, %v666
        %v668 = vrot.slane %v578, %v667
        %v669 = vlaneseq
        %v670 = vshrl.u32 %v669, 7
        %v671 = vsub.s32 0, %v670
        %v672 = vrot.slane %v592, %v671
        %v673 = vlaneseq
        %v674 = vshrl.u32 %v673, 7
        %v675 = vsub.s32 1, %v674
        %v676 = vrot.slane %v592, %v675
        %v677 = vlaneseq
        %v678 = vshrl.u32 %v677, 7
        %v679 = vsub.s32 0, %v678
        %v680 = vrot.slane %v594, %v679
        %v681 = vlaneseq
        %v682 = vshrl.u32 %v681, 7
        %v683 = vsub.s32 1, %v682
        %v684 = vrot.slane %v594, %v683
        %v685 = vlaneseq
        %v686 = vshrl.u32 %v685, 7
        %v687 = vsub.s32 0, %v686
        %v688 = vrot.slane %v596, %v687
        %v689 = vlaneseq
        %v690 = vshrl.u32 %v689, 7
        %v691 = vsub.s32 1, %v690
        %v692 = vrot.slane %v596, %v691
        %v709 = vmul.f32 %v597, %v632
        %v710 = vmul.f32 %v598, %v636
        %v711 = vmul.f32 %v599, %v632
        %v712 = vmul.f32 %v600, %v636
        %v713 = vmul.f32 %v601, %v640
        %v714 = vmul.f32 %v602, %v644
        %v715 = vmul.f32 %v603, %v640
        %v716 = vmul.f32 %v604, %v644
        %v717 = vmul.f32 %v605, %v648
        %v718 = vmul.f32 %v606, %v652
        %v719 = vmul.f32 %v607, %v648
        %v720 = vmul.f32 %v608, %v652
        %v721 = vmul.f32 %v609, %v656
        %v722 = vmul.f32 %v610, %v660
        %v723 = vmul.f32 %v611, %v656
        %v724 = vmul.f32 %v612, %v660
        %v725 = vmul.f32 %v613, %v664
        %v726 = vmul.f32 %v614, %v668
        %v727 = vmul.f32 %v615, %v664
        %v728 = vmul.f32 %v616, %v668
        %v729 = vmul.f32 %v617, %v672
        %v730 = vmul.f32 %v618, %v676
        %v731 = vmul.f32 %v619, %v672
        %v732 = vmul.f32 %v620, %v676
        %v733 = vmul.f32 %v621, %v680
        %v734 = vmul.f32 %v622, %v684
        %v735 = vmul.f32 %v623, %v680
        %v736 = vmul.f32 %v624, %v684
        %v737 = vmul.f32 %v625, %v688
        %v738 = vmul.f32 %v626, %v692
        %v739 = vmul.f32 %v627, %v688
        %v740 = vmul.f32 %v628, %v692
        %741 = vst [vmem:[%s345] sm:$0xff] %v709
        %742 = vst [vmem:[%s345 + $0x8] sm:$0xff] %v710
        %743 = vst [vmem:[%s345 + $0x10] sm:$0xff] %v711
        %744 = vst [vmem:[%s345 + $0x18] sm:$0xff] %v712
        %745 = vst [vmem:[%s345 + $0x20] sm:$0xff] %v713
        %746 = vst [vmem:[%s345 + $0x28] sm:$0xff] %v714
        %747 = vst [vmem:[%s345 + $0x30] sm:$0xff] %v715
        %748 = vst [vmem:[%s345 + $0x38] sm:$0xff] %v716
        %749 = vst [vmem:[%s345 + $0x40] sm:$0xff] %v717
        %750 = vst [vmem:[%s345 + $0x48] sm:$0xff] %v718
        %751 = vst [vmem:[%s345 + $0x50] sm:$0xff] %v719
        %752 = vst [vmem:[%s345 + $0x58] sm:$0xff] %v720
        %753 = vst [vmem:[%s345 + $0x60] sm:$0xff] %v721
        %754 = vst [vmem:[%s345 + $0x68] sm:$0xff] %v722
        %755 = vst [vmem:[%s345 + $0x70] sm:$0xff] %v723
        %756 = vst [vmem:[%s345 + $0x78] sm:$0xff] %v724
        %757 = vst [vmem:[%s345 + $0x80] sm:$0xff] %v725
        %758 = vst [vmem:[%s345 + $0x88] sm:$0xff] %v726
        %759 = vst [vmem:[%s345 + $0x90] sm:$0xff] %v727
        %760 = vst [vmem:[%s345 + $0x98] sm:$0xff] %v728
        %761 = vst [vmem:[%s345 + $0xa0] sm:$0xff] %v729
        %762 = vst [vmem:[%s345 + $0xa8] sm:$0xff] %v730
        %763 = vst [vmem:[%s345 + $0xb0] sm:$0xff] %v731
        %764 = vst [vmem:[%s345 + $0xb8] sm:$0xff] %v732
        %765 = vst [vmem:[%s345 + $0xc0] sm:$0xff] %v733
        %766 = vst [vmem:[%s345 + $0xc8] sm:$0xff] %v734
        %767 = vst [vmem:[%s345 + $0xd0] sm:$0xff] %v735
        %768 = vst [vmem:[%s345 + $0xd8] sm:$0xff] %v736
        %769 = vst [vmem:[%s345 + $0xe0] sm:$0xff] %v737
        %770 = vst [vmem:[%s345 + $0xe8] sm:$0xff] %v738
        %771 = vst [vmem:[%s345 + $0xf0] sm:$0xff] %v739
        %772 = vst [vmem:[%s345 + $0xf8] sm:$0xff] %v740
        %s773 = sand.u32 %s199, 1
        %s774 = scalar_lea.sflag [#allocation5], %s773
        %s775 = sand.u32 %s199, 1
        %s776 = smul.addr %s775, 256
        %s777 = scalar_lea.vmem [#allocation8], %s776
        // Predicated region
        $region57: #{tpu_custom_call.1} parent=43 // pred_check
          %p778 = pneg %p209
        $region58: #{tpu_custom_call.1} parent=43 // pred_check_branch
          %780 = sbr.rel (%p778) target = $region60
        $region59: #{tpu_custom_call.1} parent=43 // pred_region
          %s781 = smul.u32 2, %s33
          %s782 = smul.u32 2, %s32
          %s784 = ssub.s32 4096, 4096
          %785 = vsyncadd %s774, %s784
          %s786 = smul.addr %s781, 2
          %s787 = sadd.s32 %s782, %s786
          %s788 = smul.addr %s31, 32
          %s789 = sadd.s32 %s787, %s788
          %s790 = smul.addr %s789, 128
          %s791 = scalar_lea.hbm %s6, %s790
          %s792 = sshll.u32 %s777, 4
          %s793 = int_to_ptr.vmem [resolvable:$true] %s792
          %798 = dma.vmem_to_hbm [thread:$0]  %s793, 4096, %s791, %s774, 256, 256, 16
        $region60: #{tpu_custom_call.1} parent=43 // pred_fallthru
          _
      $region44: #{tpu_custom_call.1} parent=5 // pred_fallthru
        _
      %p799 = scmp.le.s32.totalorder 2, %s21
      // Predicated region
      $region61: #{tpu_custom_call.1} parent=5 // pred_check
        %p800 = pneg %p799
      $region62: #{tpu_custom_call.1} parent=5 // pred_check_branch
        %802 = sbr.rel (%p800) target = $region64
      $region63: #{tpu_custom_call.1} parent=5 // pred_region
        %s803 = ssub.s32 %s21, 2
        // Predicated region
        $region65: #{tpu_custom_call.1} parent=63 // pred_check
          %p804 = pneg %p215
        $region66: #{tpu_custom_call.1} parent=63 // pred_check_branch
          %806 = sbr.rel (%p804) target = $region68
        $region67: #{tpu_custom_call.1} parent=63 // pred_region
          %s807 = sand.u32 %s200, 1
          %s808 = scalar_lea.sflag [#allocation5], %s807
          %s809 = sand.u32 %s200, 1
          %s810 = smul.addr %s809, 256
          %s811 = scalar_lea.vmem [#allocation8], %s810
          %812 = dma.done %s808, 4096
        $region68: #{tpu_custom_call.1} parent=63 // pred_fallthru
          _
      $region64: #{tpu_custom_call.1} parent=5 // pred_fallthru
        _
    $region6: #{tpu_custom_call.1} parent=1 // loop_footer
      %s25 = sadd.s32 1, %s21
    $region7: #{tpu_custom_call.1} parent=1 // loop_footer_branch
      %20 = sbr.rel target = $region3
    $region8: #{tpu_custom_call.1} parent=1 // loop_exit
      _
    %813 = vsyncpa [#allocation4], 1
    %s814 = scalar_lea.sflag [#allocation4], 1
    %815 = vsyncpa %s814, 1
    %816 = vsyncpa [#allocation7], 1
    %s817 = scalar_lea.sflag [#allocation7], 1
    %818 = vsyncpa %s817, 1
    %819 = vsyncpa [#allocation5], 1
    %s820 = scalar_lea.sflag [#allocation5], 1
    %821 = vsyncpa %s820, 1

</llo_original>
